<compile_context>
chip_gen: v7x
topology: tpu7x:2x2x1
jax: 0.10.0
libtpu: 0.0.40
codegen_flags: <defaults>
</compile_context>

<pallas_src>
import numpy as np
import jax
import jax.numpy as jnp
from jax import lax
from jax.experimental import pallas as pl
from jax.experimental.pallas import tpu as pltpu

# Scaled-down model config (real BERT: D=768, 12 layers, 30k vocab).
D = 128
NUM_LAYERS = 4
VOCAB = 64
PAD_INDEX = 0.0


def _round_up(x, m):
    return ((x + m - 1) // m) * m


# ----------------------------------------------------------------------------
# Kernel 1: fused dense+tanh encoder stack.
# grid = (row_tiles, num_layers); layer axis innermost ("arbitrary"), row-tile
# axis "parallel" (shards across the two TensorCores on v7x — wrapper ensures
# >= 2 row tiles whenever N allows it).  The output block is the resident
# activation accumulator across the layer axis; the full (L, D, D) bf16 weight
# stack and (L, 1, D) bias stack are DMA'd into VMEM once (constant block
# index) and sliced per layer with a dynamic leading-axis index.
# ----------------------------------------------------------------------------
def _encoder_kernel(x_ref, w_ref, b_ref, o_ref):
    layer = pl.program_id(1)

    @pl.when(layer == 0)
    def _():
        o_ref[...] = x_ref[...]            # load bf16 activations once

    h = o_ref[...]                         # [TN, D] bf16, VMEM-resident
    acc = jnp.dot(h, w_ref[layer],         # bf16 MXU, f32 accumulate
                  preferred_element_type=jnp.float32) + b_ref[layer]
    # f32 tanh on the EUP, stored bf16 (next layer's MXU input dtype).
    # TODO(synk): on v6e/v7x a bf16 tanh doubles EUP throughput (the
    # saturating unit at these matmul sizes) at the cost of a bf16-rounded
    # argument; kept f32 here for a tight self-check.
    o_ref[...] = jnp.tanh(acc).astype(o_ref.dtype)


def encoder_stack(x, w, b, *, tn_max=512):
    """x: [N, D] bf16, w: [L, D, D] bf16, b: [L, 1, D] f32 -> [N, D] bf16."""
    n, d = x.shape
    num_layers = w.shape[0]

    # Tile selection: sublane-aligned, never a single giant full-array tile
    # (pad N instead), and >= 2 row tiles when possible so v7x's second
    # TensorCore is used.
    tn = min(tn_max, _round_up(n, 8))
    if n > 8 and pl.cdiv(n, tn) < 2:
        tn = _round_up(pl.cdiv(n, 2), 8)
    n_pad = _round_up(n, tn)
    if n_pad != n:
        x = jnp.pad(x, ((0, n_pad - n), (0, 0)))

    grid = (n_pad // tn, num_layers)
    out = pl.pallas_call(
        _encoder_kernel,
        out_shape=jax.ShapeDtypeStruct((n_pad, d), jnp.bfloat16),
        grid_spec=pltpu.PrefetchScalarGridSpec(
            num_scalar_prefetch=0,
            grid=grid,
            in_specs=[
                # activations: one HBM read per row tile (resident over layers)
                pl.BlockSpec((tn, d), lambda i, l: (i, 0)),
                # full weight / bias stacks: constant block index -> loaded once
                pl.BlockSpec((num_layers, d, d), lambda i, l: (0, 0, 0)),
                pl.BlockSpec((num_layers, 1, d), lambda i, l: (0, 0, 0)),
            ],
            out_specs=pl.BlockSpec((tn, d), lambda i, l: (i, 0)),
        ),
        compiler_params=pltpu.CompilerParams(
            dimension_semantics=("parallel", "arbitrary"),
            # Explicit scoped-VMEM limit; at real BERT sizes keep tn ~1024 on
            # v7x (64 MiB physical) and sweep larger on v5e/v6e (128 MiB).
            vmem_limit_bytes=48 * 1024 * 1024),
    )(x, w, b)
    return out[:n] if n_pad != n else out


# ----------------------------------------------------------------------------
# Kernel 2: wordpiece mean pooling + [CLS]/[SEP]/pad removal + re-padding.
# Processes TB batch rows per grid step.  The one-hot assignment matrix
# a[b, w, s] = (word_ids[b, s] == w) is built inside the kernel from the tiny
# int32 word_ids block (VPU iota+compare, overlaps the MXU) so no [B, Wp, S]
# f32 matrix ever hits HBM.  Rows for padded word slots are all-zero ->
# output row = 0 = PAD_INDEX (as in pad_sequence); word_ids == -1
# (CLS/SEP/pad) never match the iota -> excluded.
# ----------------------------------------------------------------------------
def _wordpiece_mean_kernel(wid_ref, h_ref, out_ref):
    tb, wp, _ = out_ref.shape
    s = h_ref.shape[1]
    wid = wid_ref[:, 0, :]                                        # [TB, S] int32
    word_iota = lax.broadcasted_iota(jnp.int32, (tb, wp, s), 1)   # word index
    onehot = word_iota == wid[:, None, :]                         # [TB, Wp, S]
    a = onehot.astype(jnp.bfloat16)                               # exact 0/1
    summed = jnp.einsum('bws,bsd->bwd', a, h_ref[...],            # batched MXU
                        preferred_element_type=jnp.float32)       # [TB, Wp, D]
    counts = jnp.sum(onehot.astype(jnp.float32), axis=-1, keepdims=True)
    inv = pl.reciprocal(jnp.maximum(counts, 1.0), approx=True)    # EUP slot
    out_ref[...] = summed * inv


def wordpiece_mean_pool(word_ids, hidden, wp, *, tb_max=8):
    """word_ids: [B, S] int32; hidden: [B, S, D] bf16 -> [B, Wp, D] f32."""
    b, s, d = hidden.shape
    tb = min(tb_max, b)
    b_pad = _round_up(b, tb)
    if b_pad != b:
        hidden = jnp.pad(hidden, ((0, b_pad - b), (0, 0), (0, 0)))
        word_ids = jnp.pad(word_ids, ((0, b_pad - b), (0, 0)),
                           constant_values=-1)
    wid3 = word_ids.reshape(b_pad, 1, s)                  # layout-friendly block
    out = pl.pallas_call(
        _wordpiece_mean_kernel,
        out_shape=jax.ShapeDtypeStruct((b_pad, wp, d), jnp.float32),
        grid=(b_pad // tb,),
        in_specs=[
            pl.BlockSpec((tb, 1, s), lambda i: (i, 0, 0)),
            pl.BlockSpec((tb, s, d), lambda i: (i, 0, 0)),
        ],
        out_specs=pl.BlockSpec((tb, wp, d), lambda i: (i, 0, 0)),
        compiler_params=pltpu.CompilerParams(
            dimension_semantics=("parallel",)),
    )(wid3, hidden)
    return out[:b] if b_pad != b else out


# ----------------------------------------------------------------------------
# Glue: synthetic "BERT" forward + BertEmbedding.forward equivalent.
# max_words is a *static* int (no device->host sync, jit-compatible).
# ----------------------------------------------------------------------------
def bert_embedding_forward(input_ids, word_ids, params, max_words):
    """
    input_ids: [B, S] int32 wordpiece ids (incl. CLS/SEP/pad positions)
    word_ids : [B, S] int32, word index per wordpiece; -1 for CLS/SEP/pad
    max_words: static python int, max #words per sample in the batch
    Returns  : [B, max_words, D] f32 word-level embeddings padded with 0.
    """
    B, S = input_ids.shape

    # synthetic BERT: bf16 embedding lookup (gather in glue) + fused stack.
    # TODO(synk): the gather could itself be fused into kernel 1 via
    # num_scalar_prefetch=1 + pl.Element row-gather on the embedding table.
    x = params["emb"][input_ids].reshape(B * S, D)        # [B*S, D] bf16
    h = encoder_stack(x, params["W"], params["b"])        # one Pallas kernel
    bert_out = h.reshape(B, S, D)                         # 'last' layer pooling

    # wordpiece mean pooling / special-token removal / padding (one kernel)
    wp = max(8, _round_up(max_words, 8))                  # sublane-aligned
    pooled = wordpiece_mean_pool(word_ids, bert_out, wp)
    return pooled[:, :max_words, :]


# ----------------------------------------------------------------------------
def _reference_pool(bert_out, word_ids, w_max):
    B, S, d = bert_out.shape
    out = np.full((B, w_max, d), PAD_INDEX, np.float32)
    for bi in range(B):
        for w in range(word_ids[bi].max() + 1):
            mask = word_ids[bi] == w
            if mask.any():
                out[bi, w] = bert_out[bi][mask].mean(axis=0)
    return out


if __name__ == "__main__":
    key = jax.random.PRNGKey(0)
    k_emb, k_ids, k_w, k_b = jax.random.split(key, 4)

    B, S = 2, 16
    params = {
        "emb": (0.02 * jax.random.normal(k_emb, (VOCAB, D), jnp.float32)
                ).astype(jnp.bfloat16),
        "W": (0.05 * jax.random.normal(k_w, (NUM_LAYERS, D, D), jnp.float32)
              ).astype(jnp.bfloat16),
        "b": 0.01 * jax.random.normal(k_b, (NUM_LAYERS, 1, D), jnp.float32),
    }

    input_ids = jax.random.randint(k_ids, (B, S), 0, VOCAB, dtype=jnp.int32)

    # word_ids: -1 marks [CLS]/[SEP]/padding, repeated ids = subword pieces.
    word_ids_np = np.array(
        [[-1, 0, 1, 1, 2, 3, 3, 3, 4, 5, -1, -1, -1, -1, -1, -1],   # 6 words
         [-1, 0, 0, 1, 2, 2, 3, -1, -1, -1, -1, -1, -1, -1, -1, -1]],  # 4 words
        dtype=np.int32)
    word_ids = jnp.asarray(word_ids_np)
    max_words = int(word_ids_np.max()) + 1              # host-side, static

    fwd = jax.jit(bert_embedding_forward, static_argnames=("max_words",))
    out = jax.block_until_ready(
        fwd(input_ids, word_ids, params, max_words=max_words))

    # reference: plain numpy mirroring the kernels' bf16 activation storage
    def _bf16(a):
        return np.asarray(jnp.asarray(a, jnp.float32)
                          .astype(jnp.bfloat16).astype(jnp.float32))

    emb_np = np.asarray(params["emb"].astype(jnp.float32))
    w_np = np.asarray(params["W"].astype(jnp.float32))
    b_np = np.asarray(params["b"])
    h = emb_np[np.asarray(input_ids)].reshape(B * S, D)
    for l in range(NUM_LAYERS):
        h = _bf16(np.tanh(h @ w_np[l] + b_np[l]))
    ref = _reference_pool(h.reshape(B, S, D), word_ids_np, max_words)

    assert out.shape == (B, max_words, D), out.shape
    diff = np.abs(np.asarray(out) - ref)
    # bf16 hidden states + EUP tanh/reciprocal: allow ~1 bf16 ulp worst case,
    # mean error must be much tighter.
    assert float(diff.mean()) < 1e-3, f"mean err {float(diff.mean())}"
    assert np.allclose(np.asarray(out), ref, atol=1e-2), \
        f"max err {float(diff.max())}"

    print("KERNEL_OK")
</pallas_src>

<mosaic_0001>
module attributes {stable_mosaic.version = 11 : i64} {
  func.func @_encoder_kernel(%arg0: i32, %arg1: i32, %arg2: memref<16x128xbf16, #tpu.memory_space<vmem>>, %arg3: memref<4x128x128xbf16, #tpu.memory_space<vmem>>, %arg4: memref<4x1x128xf32, #tpu.memory_space<vmem>>, %arg5: memref<16x128xbf16, #tpu.memory_space<vmem>>) attributes {dimension_semantics = [#tpu.dimension_semantics<parallel>, #tpu.dimension_semantics<arbitrary>], iteration_bounds = array<i64: 2, 4>, scalar_prefetch = 0 : i64, scratch_operands = 0 : i64, tpu.core_type = #tpu.core_type<tc>, window_params = [{transform_indices = @transform_0, window_bounds = array<i64: 16, 128>}, {pipeline_mode = #tpu.pipeline_mode<synchronous>, transform_indices = @transform_1, window_bounds = array<i64: 4, 128, 128>}, {pipeline_mode = #tpu.pipeline_mode<synchronous>, transform_indices = @transform_2, window_bounds = array<i64: 4, 1, 128>}, {transform_indices = @transform_3, window_bounds = array<i64: 16, 128>}]} {
    %c0_i32 = arith.constant 0 : i32
    %0 = arith.cmpi eq, %arg1, %c0_i32 : i32
    %1 = arith.extui %0 : i1 to i32
    %c0_i32_0 = arith.constant 0 : i32
    %2 = arith.cmpi ne, %1, %c0_i32_0 : i32
    scf.if %2 {
      %c0_8 = arith.constant 0 : index
      %c0_9 = arith.constant 0 : index
      %16 = vector.load %arg2[%c0_8, %c0_9] : memref<16x128xbf16, #tpu.memory_space<vmem>>, vector<16x128xbf16>
      %c0_10 = arith.constant 0 : index
      %c0_11 = arith.constant 0 : index
      %17 = vector.load %arg5[%c0_10, %c0_11] : memref<16x128xbf16, #tpu.memory_space<vmem>>, vector<16x128xbf16>
      tpu.vector_store %arg5[%c0_10, %c0_11], %16 {strides = array<i32>} : memref<16x128xbf16, #tpu.memory_space<vmem>>, vector<16x128xbf16>,
    } else {
    }
    %c0 = arith.constant 0 : index
    %c0_1 = arith.constant 0 : index
    %3 = vector.load %arg5[%c0, %c0_1] : memref<16x128xbf16, #tpu.memory_space<vmem>>, vector<16x128xbf16>
    %4 = arith.index_cast %arg1 : i32 to index
    %c0_2 = arith.constant 0 : index
    %c0_3 = arith.constant 0 : index
    %5 = vector.load %arg3[%4, %c0_2, %c0_3] : memref<4x128x128xbf16, #tpu.memory_space<vmem>>, vector<1x128x128xbf16>
    %6 = vector.shape_cast %5 : vector<1x128x128xbf16> to vector<128x128xbf16>
    %cst = arith.constant dense<0.000000e+00> : vector<16x128xf32>
    %7 = tpu.matmul %3, %6, %cst {dimension_numbers = #tpu.dot_dimension_numbers<[1], [0], [0], [1], [0, 0, 1, 1], [], []>} : vector<16x128xbf16>, vector<128x128xbf16>, vector<16x128xf32> -> vector<16x128xf32>
    %8 = arith.index_cast %arg1 : i32 to index
    %c0_4 = arith.constant 0 : index
    %c0_5 = arith.constant 0 : index
    %9 = vector.load %arg4[%8, %c0_4, %c0_5] : memref<4x1x128xf32, #tpu.memory_space<vmem>>, vector<1x1x128xf32>
    %10 = vector.shape_cast %9 : vector<1x1x128xf32> to vector<1x128xf32>
    %11 = vector.broadcast %10 : vector<1x128xf32> to vector<16x128xf32>
    %12 = arith.addf %7, %11 : vector<16x128xf32>
    %13 = math.tanh %12 : vector<16x128xf32>
    %14 = arith.truncf %13 : vector<16x128xf32> to vector<16x128xbf16>
    %c0_6 = arith.constant 0 : index
    %c0_7 = arith.constant 0 : index
    %15 = vector.load %arg5[%c0_6, %c0_7] : memref<16x128xbf16, #tpu.memory_space<vmem>>, vector<16x128xbf16>
    tpu.vector_store %arg5[%c0_6, %c0_7], %14 {strides = array<i32>} : memref<16x128xbf16, #tpu.memory_space<vmem>>, vector<16x128xbf16>,
    return
  }
  func.func @transform_0(%arg0: i32, %arg1: i32) -> (i32, i32) {
    %c0_i32 = arith.constant 0 : i32
    %c0_i32_0 = arith.constant 0 : i32
    return %arg0, %c0_i32 : i32, i32
  }
  func.func @transform_1(%arg0: i32, %arg1: i32) -> (i32, i32, i32) {
    %c0_i32 = arith.constant 0 : i32
    %c0_i32_0 = arith.constant 0 : i32
    %c0_i32_1 = arith.constant 0 : i32
    %c0_i32_2 = arith.constant 0 : i32
    return %c0_i32, %c0_i32_0, %c0_i32_1 : i32, i32, i32
  }
  func.func @transform_2(%arg0: i32, %arg1: i32) -> (i32, i32, i32) {
    %c0_i32 = arith.constant 0 : i32
    %c0_i32_0 = arith.constant 0 : i32
    %c0_i32_1 = arith.constant 0 : i32
    %c0_i32_2 = arith.constant 0 : i32
    return %c0_i32, %c0_i32_0, %c0_i32_1 : i32, i32, i32
  }
  func.func @transform_3(%arg0: i32, %arg1: i32) -> (i32, i32) {
    %c0_i32 = arith.constant 0 : i32
    %c0_i32_0 = arith.constant 0 : i32
    return %arg0, %c0_i32 : i32, i32
  }
}

module attributes {stable_mosaic.version = 11 : i64} {
  func.func @_wordpiece_mean_kernel(%arg0: i32, %arg1: memref<2x1x16xi32, #tpu.memory_space<vmem>>, %arg2: memref<2x16x128xbf16, #tpu.memory_space<vmem>>, %arg3: memref<2x8x128xf32, #tpu.memory_space<vmem>>) attributes {dimension_semantics = [#tpu.dimension_semantics<parallel>], iteration_bounds = array<i64: 1>, scalar_prefetch = 0 : i64, scratch_operands = 0 : i64, tpu.core_type = #tpu.core_type<tc>, window_params = [{transform_indices = @transform_0, window_bounds = array<i64: 2, 1, 16>}, {transform_indices = @transform_1, window_bounds = array<i64: 2, 16, 128>}, {transform_indices = @transform_2, window_bounds = array<i64: 2, 8, 128>}]} {
    %c0 = arith.constant 0 : index
    %c0_0 = arith.constant 0 : index
    %c0_1 = arith.constant 0 : index
    %0 = vector.load %arg1[%c0, %c0_0, %c0_1] : memref<2x1x16xi32, #tpu.memory_space<vmem>>, vector<2x1x16xi32>
    %1 = vector.shape_cast %0 : vector<2x1x16xi32> to vector<2x16xi32>
    %2 = tpu.iota {dimensions = array<i32: 1>} : vector<2x8x16xi32>
    %3 = vector.shape_cast %1 : vector<2x16xi32> to vector<2x1x16xi32>
    %4 = vector.broadcast %3 : vector<2x1x16xi32> to vector<2x8x16xi32>
    %5 = arith.cmpi eq, %2, %4 : vector<2x8x16xi32>
    %6 = arith.extui %5 : vector<2x8x16xi1> to vector<2x8x16xi32>
    %7 = arith.sitofp %6 : vector<2x8x16xi32> to vector<2x8x16xf32>
    %8 = arith.truncf %7 : vector<2x8x16xf32> to vector<2x8x16xbf16>
    %c0_2 = arith.constant 0 : index
    %c0_3 = arith.constant 0 : index
    %c0_4 = arith.constant 0 : index
    %9 = vector.load %arg2[%c0_2, %c0_3, %c0_4] : memref<2x16x128xbf16, #tpu.memory_space<vmem>>, vector<2x16x128xbf16>
    "tpu.trace_start"() <{level = 10 : i32, message = "bws,bsd->bwd"}> : () -> ()
    %cst = arith.constant dense<0.000000e+00> : vector<2x8x128xf32>
    %10 = tpu.matmul %8, %9, %cst {dimension_numbers = #tpu.dot_dimension_numbers<[2], [1], [1], [2], [0, 0, 0, 1, 1, 2], [0], [0]>} : vector<2x8x16xbf16>, vector<2x16x128xbf16>, vector<2x8x128xf32> -> vector<2x8x128xf32>
    "tpu.trace_stop"() : () -> ()
    %11 = arith.extui %5 : vector<2x8x16xi1> to vector<2x8x16xi32>
    %12 = arith.sitofp %11 : vector<2x8x16xi32> to vector<2x8x16xf32>
    %cst_5 = arith.constant dense<0.000000e+00> : vector<2x8xf32>
    %13 = vector.multi_reduction <add>, %12, %cst_5 [2] : vector<2x8x16xf32> to vector<2x8xf32>
    %14 = vector.shape_cast %13 : vector<2x8xf32> to vector<2x8x1xf32>
    %cst_6 = arith.constant 1.000000e+00 : f32
    %15 = vector.broadcast %cst_6 : f32 to vector<2x8x1xf32>
    %16 = arith.maximumf %14, %15 : vector<2x8x1xf32>
    %17 = tpu.reciprocal %16 {approx = true} : vector<2x8x1xf32> -> vector<2x8x1xf32>
    %18 = vector.broadcast %17 : vector<2x8x1xf32> to vector<2x8x128xf32>
    %19 = arith.mulf %10, %18 : vector<2x8x128xf32>
    %c0_7 = arith.constant 0 : index
    %c0_8 = arith.constant 0 : index
    %c0_9 = arith.constant 0 : index
    %20 = vector.load %arg3[%c0_7, %c0_8, %c0_9] : memref<2x8x128xf32, #tpu.memory_space<vmem>>, vector<2x8x128xf32>
    tpu.vector_store %arg3[%c0_7, %c0_8, %c0_9], %19 {strides = array<i32>} : memref<2x8x128xf32, #tpu.memory_space<vmem>>, vector<2x8x128xf32>,
    return
  }
  func.func @transform_0(%arg0: i32) -> (i32, i32, i32) {
    %c0_i32 = arith.constant 0 : i32
    %c0_i32_0 = arith.constant 0 : i32
    %c0_i32_1 = arith.constant 0 : i32
    return %arg0, %c0_i32, %c0_i32_0 : i32, i32, i32
  }
  func.func @transform_1(%arg0: i32) -> (i32, i32, i32) {
    %c0_i32 = arith.constant 0 : i32
    %c0_i32_0 = arith.constant 0 : i32
    %c0_i32_1 = arith.constant 0 : i32
    return %arg0, %c0_i32, %c0_i32_0 : i32, i32, i32
  }
  func.func @transform_2(%arg0: i32) -> (i32, i32, i32) {
    %c0_i32 = arith.constant 0 : i32
    %c0_i32_0 = arith.constant 0 : i32
    %c0_i32_1 = arith.constant 0 : i32
    return %arg0, %c0_i32, %c0_i32_0 : i32, i32, i32
  }
}

</mosaic_0001>

<llo_original>
// kernel: bert_embedding_forward.2
$region0: #{bert_embedding_forward.2}
  #allocation0 [shape = 'u32[]', space=smem, size = 0x4, offset = 0x4, fixed_abs, tag = 'smem constant byte address 0x4 - core index']
  #allocation1 [shape = 'u32[144,128]{1,0:T(1,128)}', space=vmem, size = 0x12000, scoped, tag = 'internal scratch']
  %s0 = inlined_call_operand.vmem [shape: bf16[32,128], index: 0, kind: input, shape index: {}]
  %s1 = inlined_call_operand.hbm [shape: bf16[4,128,128], index: 1, kind: input, shape index: {}]
  %s2 = inlined_call_operand.vmem [shape: f32[4,1,128], index: 2, kind: input, shape index: {}]
  %s3 = inlined_call_operand.vmem [shape: bf16[32,128], index: 3, kind: output, shape index: {}]
  %s4 = sld [smem:[#allocation0]]
  $region53: #{bert_embedding_forward.2} parent=0
    _
  %s6 = ssub.s32 1, %s4
  %s7 = scalar_select 0, %s6, %s4
  $region1: #{bert_embedding_forward.2} parent=0
    #allocation2 [shape = 'u8[131072]{0}', space=vmem, size = 0x20000, scoped, tag = 'input window, operand 1, single buffered']
    #allocation3 [shape = 's32[2]{0}', space=sflag, size = 0x8, scoped, tag = 'scoped memory for bert_embedding_forward.2']
    %8 = vsyncpa [#allocation3], 0
    loop: start=0, step=1, limit=10
    $region2: #{bert_embedding_forward.2} parent=1 // loop_pre_header
      _
    $region3: #{bert_embedding_forward.2} parent=1 // loop_header
      %s10 = sphi 0, %s14
      %p11 = scmp.ge.s32.totalorder %s10, 10
      %s17 = sphi 0, %s29
      %s18 = sphi 0, %s25
      %s19 = sphi 0, %s17
      %s20 = sphi 0, %s18
      %s21 = sphi 0, %s19
      %s22 = sphi 0, %s20
      %s32 = sphi 0, %s34
      %s35 = sphi 0, %s32
      %s36 = sphi 0, %s35
      %s52 = sphi 0, %s36
      %s56 = sphi 0, %s56
      %s58 = sphi 0, %s56
      %s59 = sphi 0, %s58
      %s73 = sphi 0, %s59
      %s77 = sphi 0, %s77
      %s79 = sphi 0, %s77
      %s80 = sphi 0, %s79
      %s94 = sphi 0, %s80
      %s100 = sphi 0, %s102
      %s103 = sphi 0, %s100
      %s104 = sphi 0, %s103
      %s120 = sphi 0, %s104
    $region4: #{bert_embedding_forward.2} parent=1 // loop_header_branch
      %13 = sbr.rel (%p11) target = $region8
    $region5: #{bert_embedding_forward.2} parent=1 // loop_body
      %s15 = ssub.s32 %s10, 1
      %s16 = ssub.s32 %s10, 2
      %s23 = sadd.s32 1, %s18
      %p24 = scmp.ge.s32.totalorder %s23, 4
      %s25 = scalar_select %p24, 0, %s23
      %s26 = sadd.s32 1, %s17
      %s27 = scalar_select %p24, %s26, %s17
      %p28 = scmp.ge.s32.totalorder %s27, 2
      %s29 = scalar_select %p28, 0, %s27
      %s30 = ssub.s32 %s17, %s29
      %p31 = scmp.eq.s32.totalorder %s30, 0
      %s33 = sadd.s32 %s32, 1
      %s34 = scalar_select %p31, %s32, %s33
      %p37 = pneg %p31
      %p38 = scmp.eq.s32.totalorder %s10, 7
      %p39 = por %p37, %p38
      %p40 = scmp.ne.s32.totalorder %s32, %s35
      %p41 = scmp.eq.s32.totalorder %s10, 0
      %p42 = por %p40, %p41
      %p43 = scmp.ne.s32.totalorder %s32, %s35
      %p44 = scmp.eq.s32.totalorder %s15, 7
      %p45 = por %p43, %p44
      %p46 = scmp.ne.s32.totalorder %s35, %s36
      %p47 = scmp.eq.s32.totalorder %s15, 0
      %p48 = por %p46, %p47
      %p49 = scmp.ne.s32.totalorder %s35, %s36
      %p50 = scmp.eq.s32.totalorder %s16, 7
      %p51 = por %p49, %p50
      %p53 = scmp.ne.s32.totalorder %s36, %s52
      %p54 = scmp.eq.s32.totalorder %s16, 0
      %p55 = por %p53, %p54
      %s57 = sadd.s32 %s56, 1
      %p60 = scmp.eq.s32.totalorder %s10, 7
      %p61 = scmp.ne.s32.totalorder %s56, %s58
      %p62 = scmp.eq.s32.totalorder %s10, 0
      %p63 = por %p61, %p62
      %p64 = scmp.ne.s32.totalorder %s56, %s58
      %p65 = scmp.eq.s32.totalorder %s15, 7
      %p66 = por %p64, %p65
      %p67 = scmp.ne.s32.totalorder %s58, %s59
      %p68 = scmp.eq.s32.totalorder %s15, 0
      %p69 = por %p67, %p68
      %p70 = scmp.ne.s32.totalorder %s58, %s59
      %p71 = scmp.eq.s32.totalorder %s16, 7
      %p72 = por %p70, %p71
      %p74 = scmp.ne.s32.totalorder %s59, %s73
      %p75 = scmp.eq.s32.totalorder %s16, 0
      %p76 = por %p74, %p75
      %s78 = sadd.s32 %s77, 1
      %p81 = scmp.eq.s32.totalorder %s10, 7
      %p82 = scmp.ne.s32.totalorder %s77, %s79
      %p83 = scmp.eq.s32.totalorder %s10, 0
      %p84 = por %p82, %p83
      %p85 = scmp.ne.s32.totalorder %s77, %s79
      %p86 = scmp.eq.s32.totalorder %s15, 7
      %p87 = por %p85, %p86
      %p88 = scmp.ne.s32.totalorder %s79, %s80
      %p89 = scmp.eq.s32.totalorder %s15, 0
      %p90 = por %p88, %p89
      %p91 = scmp.ne.s32.totalorder %s79, %s80
      %p92 = scmp.eq.s32.totalorder %s16, 7
      %p93 = por %p91, %p92
      %p95 = scmp.ne.s32.totalorder %s80, %s94
      %p96 = scmp.eq.s32.totalorder %s16, 0
      %p97 = por %p95, %p96
      %s98 = ssub.s32 %s17, %s29
      %p99 = scmp.eq.s32.totalorder %s98, 0
      %s101 = sadd.s32 %s100, 1
      %s102 = scalar_select %p99, %s100, %s101
      %p105 = pneg %p99
      %p106 = scmp.eq.s32.totalorder %s10, 7
      %p107 = por %p105, %p106
      %p108 = scmp.ne.s32.totalorder %s100, %s103
      %p109 = scmp.eq.s32.totalorder %s10, 0
      %p110 = por %p108, %p109
      %p111 = scmp.ne.s32.totalorder %s100, %s103
      %p112 = scmp.eq.s32.totalorder %s15, 7
      %p113 = por %p111, %p112
      %p114 = scmp.ne.s32.totalorder %s103, %s104
      %p115 = scmp.eq.s32.totalorder %s15, 0
      %p116 = por %p114, %p115
      %p117 = scmp.ne.s32.totalorder %s103, %s104
      %p118 = scmp.eq.s32.totalorder %s16, 7
      %p119 = por %p117, %p118
      %p121 = scmp.ne.s32.totalorder %s104, %s120
      %p122 = scmp.eq.s32.totalorder %s16, 0
      %p123 = por %p121, %p122
      %p124 = scmp.le.s32.totalorder 1, %s10
      %p125 = scmp.lt.s32.totalorder %s10, 9
      %p126 = pnand %p124, %p125
      %p127 = pneg %p126
      // Predicated region
      $region9: #{bert_embedding_forward.2} parent=5 // pred_check
        _
      $region10: #{bert_embedding_forward.2} parent=5 // pred_check_branch
        %129 = sbr.rel (%p126) target = $region12
      $region11: #{bert_embedding_forward.2} parent=5 // pred_region
        %s130 = ssub.s32 %s10, 1
        // Predicated region
        $region13: #{bert_embedding_forward.2} parent=11 // pred_check
          %p131 = pneg %p69
        $region14: #{bert_embedding_forward.2} parent=11 // pred_check_branch
          %133 = sbr.rel (%p131) target = $region16
        $region15: #{bert_embedding_forward.2} parent=11 // pred_region
          %s135 = ssub.s32 4096, 4096
          %136 = vsyncadd [#allocation3], %s135
          %s137 = sshll.u32 [#allocation2], 4
          %s138 = int_to_ptr.vmem [resolvable:$true] %s137
          %143 = dma.hbm_to_vmem [thread:$0]  %s1, 4096, %s138, [#allocation3], 64, 64, 4
        $region16: #{bert_embedding_forward.2} parent=11 // pred_fallthru
          _
        // Predicated region
        $region17: #{bert_embedding_forward.2} parent=11 // pred_check
          %p144 = pneg %p90
        $region18: #{bert_embedding_forward.2} parent=11 // pred_check_branch
          %146 = sbr.rel (%p144) target = $region20
        $region19: #{bert_embedding_forward.2} parent=11 // pred_region
          _
        $region20: #{bert_embedding_forward.2} parent=11 // pred_fallthru
          _
      $region12: #{bert_embedding_forward.2} parent=5 // pred_fallthru
        _
      %p147 = scmp.lt.s32.totalorder %s10, 8
      // Predicated region
      $region21: #{bert_embedding_forward.2} parent=5 // pred_check
        %p148 = pneg %p147
      $region22: #{bert_embedding_forward.2} parent=5 // pred_check_branch
        %150 = sbr.rel (%p148) target = $region24
      $region23: #{bert_embedding_forward.2} parent=5 // pred_region
        // Predicated region
        $region25: #{bert_embedding_forward.2} parent=23 // pred_check
          %p151 = pneg %p42
        $region26: #{bert_embedding_forward.2} parent=23 // pred_check_branch
          %153 = sbr.rel (%p151) target = $region28
        $region27: #{bert_embedding_forward.2} parent=23 // pred_region
          %s154 = smul.u32 2, %s17
          %p155 = scmp.lt.s32.totalorder %s154, 3
          %s156 = scalar_select %p155, %s154, 3
          %s157 = smul.addr %s156, 4
          %s158 = scalar_lea.vmem %s0, %s157
          %s159 = smul.u32 2, %s17
        $region28: #{bert_embedding_forward.2} parent=23 // pred_fallthru
          _
      $region24: #{bert_embedding_forward.2} parent=5 // pred_fallthru
        _
      %p160 = scmp.le.s32.totalorder 1, %s10
      %p161 = scmp.lt.s32.totalorder %s10, 9
      %p162 = pnand %p160, %p161
      %p163 = pneg %p162
      // Predicated region
      $region29: #{bert_embedding_forward.2} parent=5 // pred_check
        _
      $region30: #{bert_embedding_forward.2} parent=5 // pred_check_branch
        %165 = sbr.rel (%p162) target = $region32
      $region31: #{bert_embedding_forward.2} parent=5 // pred_region
        %s166 = ssub.s32 %s10, 1
        // Predicated region
        $region33: #{bert_embedding_forward.2} parent=31 // pred_check
          %p167 = pneg %p69
        $region34: #{bert_embedding_forward.2} parent=31 // pred_check_branch
          %169 = sbr.rel (%p167) target = $region36
        $region35: #{bert_embedding_forward.2} parent=31 // pred_region
          %170 = dma.done [#allocation3], 4096
        $region36: #{bert_embedding_forward.2} parent=31 // pred_fallthru
          _
        %s171 = smul.u32 2, %s19
        %p172 = scmp.lt.s32.totalorder %s171, 3
        %s173 = scalar_select %p172, %s171, 3
        %s174 = smul.addr %s173, 4
        %s175 = scalar_lea.vmem %s0, %s174
        %p176 = pneg %p48
        %p177 = pneg %p45
        %p178 = pneg %p69
        %p179 = pneg %p66
        %p180 = pneg %p90
        %p181 = pneg %p87
        %p182 = pneg %p116
        %p183 = pneg %p113
        %s184 = smul.u32 2, %s19
        %p185 = scmp.lt.s32.totalorder %s184, 3
        %s186 = scalar_select %p185, %s184, 3
        %s187 = smul.addr %s186, 4
        %s188 = scalar_lea.vmem %s3, %s187
        %s189 = smul.u32 2, %s19
        %p190 = scmp.lt.s32.totalorder %s189, 3
        %s191 = scalar_select %p190, %s189, 3
        %s192 = smul.addr %s191, 4
        %s193 = scalar_lea.vmem %s0, %s192
        %s194 = smul.u32 2, %s19
        %s195 = smul.u32 2, %s19
        %p196 = scmp.lt.s32.totalorder %s195, 3
        %s197 = scalar_select %p196, %s195, 3
        %s198 = smul.addr %s197, 4
        %s199 = scalar_lea.vmem %s3, %s198
        %s200 = smul.u32 2, %s19
        %p202 = scmp.eq.s32.totalorder %s20, 0
        // Predicated region
        $region37: #{bert_embedding_forward.2} parent=31 // pred_check
          %p203 = pneg %p202
        $region38: #{bert_embedding_forward.2} parent=31 // pred_check_branch
          %205 = sbr.rel (%p203) target = $region40
        $region39: #{bert_embedding_forward.2} parent=31 // pred_region
          %v206 = vld [vmem:[%s193] sm:$0xf]
          %v207 = vld [vmem:[%s193 + $0x4] sm:$0xf]
          %208 = vst [vmem:[%s199] sm:$0xf] %v206
          %209 = vst [vmem:[%s199 + $0x4] sm:$0xf] %v207
        $region40: #{bert_embedding_forward.2} parent=31 // pred_fallthru
          _
        %v210 = vld [vmem:[%s199] sm:$0xf]
        %v211 = vld [vmem:[%s199 + $0x4] sm:$0xf]
        %s212 = smul.u32 %s20, 16
        %s213 = smul.addr %s212, 4
        %s214 = scalar_lea.vmem [#allocation2], %s213
        %v215 = vld [vmem:[%s214] sm:$0xf]
        %v216 = vld [vmem:[%s214 + $0x4] sm:$0xf]
        %v217 = vld [vmem:[%s214 + $0x8] sm:$0xf]
        %v218 = vld [vmem:[%s214 + $0xc] sm:$0xf]
        %v219 = vld [vmem:[%s214 + $0x10] sm:$0xf]
        %v220 = vld [vmem:[%s214 + $0x14] sm:$0xf]
        %v221 = vld [vmem:[%s214 + $0x18] sm:$0xf]
        %v222 = vld [vmem:[%s214 + $0x1c] sm:$0xf]
        %v223 = vld [vmem:[%s214 + $0x20] sm:$0xf]
        %v224 = vld [vmem:[%s214 + $0x24] sm:$0xf]
        %v225 = vld [vmem:[%s214 + $0x28] sm:$0xf]
        %v226 = vld [vmem:[%s214 + $0x2c] sm:$0xf]
        %v227 = vld [vmem:[%s214 + $0x30] sm:$0xf]
        %v228 = vld [vmem:[%s214 + $0x34] sm:$0xf]
        %v229 = vld [vmem:[%s214 + $0x38] sm:$0xf]
        %v230 = vld [vmem:[%s214 + $0x3c] sm:$0xf]
        %s231 = scalar_lea.vmem %s2, %s20
        %v232 = vld [vmem:[%s231] sm:$0x1]
        %v234 = vlaneseq
        %v235 = vshrl.u32 %v234, 7
        %v236 = vsub.s32 0, %v235
        %v237 = vrot.slane %v232, %v236
        %v241 = vunpack.c.l.b16 %v210
        %v242 = vunpack.c.l.b16 %v211
        %v243 = vpack.c.b16 %v242, %v241
        %v261 = vunpack.c.l.b16 %v215
        %v262 = vunpack.c.l.b16 %v216
        %v263 = vunpack.c.l.b16 %v217
        %v264 = vunpack.c.l.b16 %v218
        %v265 = vunpack.c.l.b16 %v219
        %v266 = vunpack.c.l.b16 %v220
        %v267 = vunpack.c.l.b16 %v221
        %v268 = vunpack.c.l.b16 %v222
        %v269 = vunpack.c.l.b16 %v223
        %v270 = vunpack.c.l.b16 %v224
        %v271 = vunpack.c.l.b16 %v225
        %v272 = vunpack.c.l.b16 %v226
        %v273 = vunpack.c.l.b16 %v227
        %v274 = vunpack.c.l.b16 %v228
        %v275 = vunpack.c.l.b16 %v229
        %v276 = vunpack.c.l.b16 %v230
        %v277 = vpack.c.b16 %v262, %v261
        %v278 = vpack.c.b16 %v264, %v263
        %v279 = vpack.c.b16 %v266, %v265
        %v280 = vpack.c.b16 %v268, %v267
        %v281 = vpack.c.b16 %v270, %v269
        %v282 = vpack.c.b16 %v272, %v271
        %v283 = vpack.c.b16 %v274, %v273
        %v284 = vpack.c.b16 %v276, %v275
        %293 = vmatprep.subr.bf16.mxu0 0
        %294 = vmatpush1.bf16.msra.mxu0 %v277
        %295 = vmatprep.subr.bf16.mxu0 0
        %296 = vmatpush1.bf16.msra.mxu0 %v278
        %297 = vmatprep.subr.bf16.mxu0 0
        %298 = vmatpush1.bf16.msra.mxu0 %v279
        %299 = vmatprep.subr.bf16.mxu0 0
        %300 = vmatpush1.bf16.msra.mxu0 %v280
        %301 = vmatprep.subr.bf16.mxu0 0
        %302 = vmatpush1.bf16.msra.mxu0 %v281
        %303 = vmatprep.subr.bf16.mxu0 0
        %304 = vmatpush1.bf16.msra.mxu0 %v282
        %305 = vmatprep.subr.bf16.mxu0 0
        %306 = vmatpush1.bf16.msra.mxu0 %v283
        %307 = vmatprep.subr.bf16.mxu0 0
        %308 = vmatpush1.bf16.msra.mxu0 %v284
        %309 = vmatprep.subr.bf16.mxu0 0
        %310 = vmatpush1.bf16.msra.mxu0 0
        %311 = vmatprep.subr.bf16.mxu0 0
        %312 = vmatpush1.bf16.msra.mxu0 0
        %313 = vmatprep.subr.bf16.mxu0 0
        %314 = vmatpush1.bf16.msra.mxu0 0
        %315 = vmatprep.subr.bf16.mxu0 0
        %316 = vmatpush1.bf16.msra.mxu0 0
        %317 = vmatprep.subr.bf16.mxu0 0
        %318 = vmatpush1.bf16.msra.mxu0 0
        %319 = vmatprep.subr.bf16.mxu0 0
        %320 = vmatpush1.bf16.msra.mxu0 0
        %321 = vmatprep.subr.bf16.mxu0 0
        %322 = vmatpush1.bf16.msra.mxu0 0
        %323 = vmatprep.subr.bf16.mxu0 0
        %324 = vmatpush1.bf16.msra.mxu0 0
        %325 = vmatprep.mubr.bf16.mxu0 0
        %326 = vmatmul.mubr.bf16.gmra.mrb[0].mxu0 %v243
        %v327 = vpop.f32.mrb[0].mxu0
        %v328 = vadd.f32 %v237, %v327
        %v329 = vpop.f32.mrb[0].mxu0
        %v330 = vpop.f32.mrb[0].mxu0
        %v331 = vadd.f32 %v237, %v330
        %v332 = vpop.f32.mrb[0].mxu0
        %333 = vdwg.mxu0
        %v334 = vtanh.pop %v328
        %v335 = vtanh.pop %v331
        %v336 = vpack.c.bf16 %v335, %v334
        %v338 = vunpack.c.l.b16 %v336
        %v339 = vunpack.c.h.b16 %v336
        %v340 = vpack.c.b16 %v338, %v338
        %v341 = vpack.c.b16 %v339, %v339
        %344 = vst [vmem:[%s199] sm:$0xf] %v340
        %345 = vst [vmem:[%s199 + $0x4] sm:$0xf] %v341
        %s346 = smul.u32 2, %s19
        %p347 = scmp.lt.s32.totalorder %s346, 3
        %s348 = scalar_select %p347, %s346, 3
        %s349 = smul.addr %s348, 4
        %s350 = scalar_lea.vmem %s3, %s349
        // Predicated region
        $region41: #{bert_embedding_forward.2} parent=31 // pred_check
          %p351 = pneg %p113
        $region42: #{bert_embedding_forward.2} parent=31 // pred_check_branch
          %353 = sbr.rel (%p351) target = $region44
        $region43: #{bert_embedding_forward.2} parent=31 // pred_region
          %s354 = smul.u32 2, %s19
        $region44: #{bert_embedding_forward.2} parent=31 // pred_fallthru
          _
      $region32: #{bert_embedding_forward.2} parent=5 // pred_fallthru
        _
      %p355 = scmp.le.s32.totalorder 2, %s10
      // Predicated region
      $region45: #{bert_embedding_forward.2} parent=5 // pred_check
        %p356 = pneg %p355
      $region46: #{bert_embedding_forward.2} parent=5 // pred_check_branch
        %358 = sbr.rel (%p356) target = $region48
      $region47: #{bert_embedding_forward.2} parent=5 // pred_region
        %s359 = ssub.s32 %s10, 2
        // Predicated region
        $region49: #{bert_embedding_forward.2} parent=47 // pred_check
          %p360 = pneg %p119
        $region50: #{bert_embedding_forward.2} parent=47 // pred_check_branch
          %362 = sbr.rel (%p360) target = $region52
        $region51: #{bert_embedding_forward.2} parent=47 // pred_region
          %s363 = smul.u32 2, %s21
          %p364 = scmp.lt.s32.totalorder %s363, 3
          %s365 = scalar_select %p364, %s363, 3
          %s366 = smul.addr %s365, 4
          %s367 = scalar_lea.vmem %s3, %s366
        $region52: #{bert_embedding_forward.2} parent=47 // pred_fallthru
          _
      $region48: #{bert_embedding_forward.2} parent=5 // pred_fallthru
        _
    $region6: #{bert_embedding_forward.2} parent=1 // loop_footer
      %s14 = sadd.s32 1, %s10
    $region7: #{bert_embedding_forward.2} parent=1 // loop_footer_branch
      %9 = sbr.rel target = $region3
    $region8: #{bert_embedding_forward.2} parent=1 // loop_exit
      _
    %368 = vsyncpa [#allocation3], 1
    %s369 = scalar_lea.sflag [#allocation3], 1
    %370 = vsyncpa %s369, 1

// kernel: bert_embedding_forward.3
$region0: #{bert_embedding_forward.3}
  #allocation0 [shape = 'u32[]', space=smem, size = 0x4, offset = 0x4, fixed_abs, tag = 'smem constant byte address 0x4 - core index']
  #allocation1 [shape = 'u32[144,128]{1,0:T(1,128)}', space=vmem, size = 0x12000, scoped, tag = 'internal scratch']
  %s0 = inlined_call_operand.vmem [shape: s32[2,1,16], index: 0, kind: input, shape index: {}]
  %s1 = inlined_call_operand.vmem [shape: bf16[2,16,128], index: 1, kind: input, shape index: {}]
  %s2 = inlined_call_operand.vmem [shape: f32[2,8,128], index: 2, kind: output, shape index: {}]
  %s3 = sld [smem:[#allocation0]]
  $region18: #{bert_embedding_forward.3} parent=0
    _
  %s5 = ssub.s32 1, %s3
  %s6 = scalar_select 0, %s5, %s3
  // Predicated region
  $region2: #{bert_embedding_forward.3} parent=0 // pred_check
    _
  $region3: #{bert_embedding_forward.3} parent=0 // pred_check_branch
    %8 = sbr.rel (0) target = $region5
  $region4: #{bert_embedding_forward.3} parent=0 // pred_region
    _
  $region5: #{bert_embedding_forward.3} parent=0 // pred_fallthru
    _
  // Predicated region
  $region6: #{bert_embedding_forward.3} parent=0 // pred_check
    _
  $region7: #{bert_embedding_forward.3} parent=0 // pred_check_branch
    %10 = sbr.rel (0) target = $region9
  $region8: #{bert_embedding_forward.3} parent=0 // pred_region
    _
  $region9: #{bert_embedding_forward.3} parent=0 // pred_fallthru
    _
  %v12 = vld [vmem:[%s0] sm:$0x1]
  %v13 = vld [vmem:[%s0 + $0x1] sm:$0x1]
  %v14 = vlaneseq
  %v15 = vshrl.u32 %v14, 7
  %v16 = vlaneseq
  %v17 = vshrl.u32 %v16, 7
  %v18 = vsub.s32 0, %v17
  %v19 = vrot.slane %v12, %v18
  %v20 = vlaneseq
  %v21 = vshrl.u32 %v20, 7
  %v22 = vsub.s32 0, %v21
  %v23 = vrot.slane %v13, %v22
  %vm24 = vcmp.eq.s32.totalorder %v15, %v19
  %vm25 = vcmp.eq.s32.totalorder %v15, %v23
  %v26 = vsel %vm24, 1, 0
  %v27 = vsel %vm25, 1, 0
  %v28 = vcvt.s32.f32 %v26
  %v29 = vcvt.s32.f32 %v27
  %v30 = vpack.c.bf16 %v28, %v28
  %v31 = vpack.c.bf16 %v29, %v29
  %v32 = vld [vmem:[%s1] sm:$0xf]
  %v33 = vld [vmem:[%s1 + $0x4] sm:$0xf]
  %v34 = vld [vmem:[%s1 + $0x8] sm:$0xf]
  %v35 = vld [vmem:[%s1 + $0xc] sm:$0xf]
  %v38 = vunpack.c.l.b16 %v32
  %v39 = vunpack.c.l.b16 %v33
  %v40 = vpack.c.b16 %v39, %v38
  %vm42 = vcmask 130048
  %v44 = vsel %vm42, %v30, 0
  %46 = vmatprep.subr.bf16.mxu0 0
  %47 = vmatpush1.bf16.msra.mxu0 %v40
  %48 = vmatprep.subr.bf16.mxu0 0
  %49 = vmatpush1.bf16.msra.mxu0 0
  %50 = vmatprep.subr.bf16.mxu0 0
  %51 = vmatpush1.bf16.msra.mxu0 0
  %52 = vmatprep.subr.bf16.mxu0 0
  %53 = vmatpush1.bf16.msra.mxu0 0
  %54 = vmatprep.subr.bf16.mxu0 0
  %55 = vmatpush1.bf16.msra.mxu0 0
  %56 = vmatprep.subr.bf16.mxu0 0
  %57 = vmatpush1.bf16.msra.mxu0 0
  %58 = vmatprep.subr.bf16.mxu0 0
  %59 = vmatpush1.bf16.msra.mxu0 0
  %60 = vmatprep.subr.bf16.mxu0 0
  %61 = vmatpush1.bf16.msra.mxu0 0
  %62 = vmatprep.subr.bf16.mxu0 0
  %63 = vmatpush1.bf16.msra.mxu0 0
  %64 = vmatprep.subr.bf16.mxu0 0
  %65 = vmatpush1.bf16.msra.mxu0 0
  %66 = vmatprep.subr.bf16.mxu0 0
  %67 = vmatpush1.bf16.msra.mxu0 0
  %68 = vmatprep.subr.bf16.mxu0 0
  %69 = vmatpush1.bf16.msra.mxu0 0
  %70 = vmatprep.subr.bf16.mxu0 0
  %71 = vmatpush1.bf16.msra.mxu0 0
  %72 = vmatprep.subr.bf16.mxu0 0
  %73 = vmatpush1.bf16.msra.mxu0 0
  %74 = vmatprep.subr.bf16.mxu0 0
  %75 = vmatpush1.bf16.msra.mxu0 0
  %76 = vmatprep.subr.bf16.mxu0 0
  %77 = vmatpush1.bf16.msra.mxu0 0
  %78 = vmatprep.mubr.bf16.mxu0 0
  %79 = vmatmul.mubr.bf16.gmra.mrb[0].mxu0 %v44
  %v80 = vpop.f32.mrb[0].mxu0
  %v81 = vadd.f32 0.0, %v80
  %v82 = vpop.f32.mrb[0].mxu0
  %v83 = vpop.f32.mrb[0].mxu0
  %v84 = vpop.f32.mrb[0].mxu0
  %85 = vdwg.mxu0
  %v88 = vunpack.c.l.b16 %v34
  %v89 = vunpack.c.l.b16 %v35
  %v90 = vpack.c.b16 %v89, %v88
  %v93 = vsel %vm42, %v31, 0
  %95 = vmatprep.subr.bf16.mxu0 0
  %96 = vmatpush1.bf16.msra.mxu0 %v90
  %97 = vmatprep.subr.bf16.mxu0 0
  %98 = vmatpush1.bf16.msra.mxu0 0
  %99 = vmatprep.subr.bf16.mxu0 0
  %100 = vmatpush1.bf16.msra.mxu0 0
  %101 = vmatprep.subr.bf16.mxu0 0
  %102 = vmatpush1.bf16.msra.mxu0 0
  %103 = vmatprep.subr.bf16.mxu0 0
  %104 = vmatpush1.bf16.msra.mxu0 0
  %105 = vmatprep.subr.bf16.mxu0 0
  %106 = vmatpush1.bf16.msra.mxu0 0
  %107 = vmatprep.subr.bf16.mxu0 0
  %108 = vmatpush1.bf16.msra.mxu0 0
  %109 = vmatprep.subr.bf16.mxu0 0
  %110 = vmatpush1.bf16.msra.mxu0 0
  %111 = vmatprep.subr.bf16.mxu0 0
  %112 = vmatpush1.bf16.msra.mxu0 0
  %113 = vmatprep.subr.bf16.mxu0 0
  %114 = vmatpush1.bf16.msra.mxu0 0
  %115 = vmatprep.subr.bf16.mxu0 0
  %116 = vmatpush1.bf16.msra.mxu0 0
  %117 = vmatprep.subr.bf16.mxu0 0
  %118 = vmatpush1.bf16.msra.mxu0 0
  %119 = vmatprep.subr.bf16.mxu0 0
  %120 = vmatpush1.bf16.msra.mxu0 0
  %121 = vmatprep.subr.bf16.mxu0 0
  %122 = vmatpush1.bf16.msra.mxu0 0
  %123 = vmatprep.subr.bf16.mxu0 0
  %124 = vmatpush1.bf16.msra.mxu0 0
  %125 = vmatprep.subr.bf16.mxu0 0
  %126 = vmatpush1.bf16.msra.mxu0 0
  %127 = vmatprep.mubr.bf16.mxu0 0
  %128 = vmatmul.mubr.bf16.gmra.mrb[0].mxu0 %v93
  %v129 = vpop.f32.mrb[0].mxu0
  %v130 = vadd.f32 0.0, %v129
  %v131 = vpop.f32.mrb[0].mxu0
  %v132 = vpop.f32.mrb[0].mxu0
  %v133 = vpop.f32.mrb[0].mxu0
  %134 = vdwg.mxu0
  %v135 = vsel %vm42, %v28, 0.0
  %136 = vadd.xlane.f32.xlu0 %v135
  %v137 = vpop.xlane.xlu0 %136
  %v138 = vsel %vm42, %v29, 0.0
  %139 = vadd.xlane.f32.xlu0 %v138
  %v140 = vpop.xlane.xlu0 %139
  %v141 = vmax.f32 %v137, 1.0
  %v142 = vmax.f32 %v140, 1.0
  %v143 = vrcp.pop %v141
  %v144 = vrcp.pop %v142
  %v145 = vmul.f32 %v81, %v143
  %v146 = vmul.f32 %v130, %v144
  %147 = vst [vmem:[%s2] sm:$0xff] %v145
  %148 = vst [vmem:[%s2 + $0x8] sm:$0xff] %v146
  // Predicated region
  $region10: #{bert_embedding_forward.3} parent=0 // pred_check
    _
  $region11: #{bert_embedding_forward.3} parent=0 // pred_check_branch
    %150 = sbr.rel (0) target = $region13
  $region12: #{bert_embedding_forward.3} parent=0 // pred_region
    _
  $region13: #{bert_embedding_forward.3} parent=0 // pred_fallthru
    _
  // Predicated region
  $region14: #{bert_embedding_forward.3} parent=0 // pred_check
    _
  $region15: #{bert_embedding_forward.3} parent=0 // pred_check_branch
    %152 = sbr.rel (0) target = $region17
  $region16: #{bert_embedding_forward.3} parent=0 // pred_region
    _
  $region17: #{bert_embedding_forward.3} parent=0 // pred_fallthru
    _

</llo_original>
